<compile_context>
chip_gen: v7x
topology: tpu7x:2x2x1
jax: 0.10.0
libtpu: 0.0.40
codegen_flags: <defaults>
</compile_context>

<pallas_src>
import math

import jax
import jax.numpy as jnp
from jax.experimental import pallas as pl
from jax.experimental.pallas import tpu as pltpu

_SQRT2 = math.sqrt(2.0)
_POS_MU, _POS_INV = 0.2, 1.0 / (0.5 * _SQRT2)     # weight_calculation(pos, 0.5, 0.2)
_NEG_MU, _NEG_INV = 0.05, 1.0 / (0.05 * _SQRT2)   # weight_calculation(neg, 0.05, 0.05)

# Eigen / XLA f32 erf rational polynomial (valid with clamp to [-4, 4]).
_ERF_ALPHA = (-2.72614225801306e-10, 2.77068142495902e-08,
              -2.10102402082508e-06, -5.69250639462346e-05,
              -7.34990630326855e-04, -2.95459980854025e-03,
              -1.60960333262415e-02)
_ERF_BETA = (-1.45660718464996e-05, -2.13374055278905e-04,
             -1.68282697438203e-03, -7.37332916720468e-03,
             -1.42647390514189e-02)


def _erf_f32(x):
    """f32 erf; the divide goes to the (otherwise idle) EUP via approx reciprocal."""
    x = jnp.clip(x, -4.0, 4.0)
    x2 = x * x
    p = jnp.float32(_ERF_ALPHA[0])
    for c in _ERF_ALPHA[1:]:
        p = p * x2 + jnp.float32(c)
    q = jnp.float32(_ERF_BETA[0])
    for c in _ERF_BETA[1:]:
        q = q * x2 + jnp.float32(c)
    r = pl.reciprocal(q, approx=True)   # EUP slot
    r = r * (2.0 - q * r)               # one Newton step -> ~f32-exact 1/q
    return x * p * r


def _row_norm_kernel(x_ref, o_ref):
    x = x_ref[...].astype(jnp.float32)
    o_ref[...] = jnp.sqrt(jnp.sum(x * x, axis=-1, keepdims=True))


def _quality_loss_kernel(nc_ref, nr_ref, qc_ref, qr_ref, vc_ref, vr_ref, m_ref,
                         out_ref, acc_ref):
    ci = pl.program_id(1)

    @pl.when(ci == 0)
    def _init():
        acc_ref[...] = jnp.zeros_like(acc_ref)

    nc = nc_ref[...]          # [TR, 1]  row norms
    nr = nr_ref[...]          # [1, TC]  col norms (same precomputed vector)
    qc = qc_ref[...]          # [TR, 1]  labels
    qr = qr_ref[...]          # [1, TC]
    m = m_ref[0]

    # pairwise_distance_torch == | ||x_i|| - ||x_j|| |; diagonal is exactly 0
    # (bitwise identical norms), so no explicit off-diagonal mask is needed.
    pdist = jnp.abs(nc - nr)                                        # [TR, TC]

    pos_mask = qc == qr                                             # [TR, TC]
    q_mask = jnp.logical_not(jnp.logical_xor(qc != 2.0, qr != 2.0))  # [TR, TC]

    # pos/neg cells are disjoint -> a single fused erf over the tile.
    pair = jnp.where(pos_mask, pdist, jnp.maximum(0.0, m - pdist))
    arg = jnp.where(pos_mask,
                    (pair - _POS_MU) * _POS_INV,
                    (pair - _NEG_MU) * _NEG_INV)
    w = 0.5 * (1.0 + _erf_f32(arg))

    vm = vc_ref[...] * vr_ref[...]                                  # padding mask
    loss = jnp.where(q_mask, w * pair, 0.0) * vm

    acc_ref[...] += jnp.sum(loss, axis=0, keepdims=True)            # [1, TC]

    @pl.when(ci == pl.num_programs(1) - 1)
    def _finalize():
        out_ref[...] = acc_ref[...]


def _round_up(x, mult):
    return ((x + mult - 1) // mult) * mult


def quality_loss(represent, q, m):
    """Pallas equivalent of quality_loss.forward(represent, q, m, d)."""
    n, d = represent.shape
    if n == 1:
        # torch branch: loss = zeros(1) for a single element
        return jnp.zeros((), jnp.float32)

    tile_r = 256 if n >= 256 else _round_up(n, 8)
    tile_c = 512 if n >= 512 else _round_up(n, 128)
    np_r = _round_up(n, tile_r)
    np_c = _round_up(n, tile_c)

    # --- stage 1: per-row L2 norms (N*D work), row-tiled --------------------
    rep_p = jnp.pad(represent, ((0, np_r - n), (0, 0)))
    norms_col = pl.pallas_call(
        _row_norm_kernel,
        out_shape=jax.ShapeDtypeStruct((np_r, 1), jnp.float32),
        grid=(np_r // tile_r,),
        in_specs=[pl.BlockSpec((tile_r, d), lambda i: (i, 0))],
        out_specs=pl.BlockSpec((tile_r, 1), lambda i: (i, 0)),
        compiler_params=pltpu.CompilerParams(dimension_semantics=("parallel",)),
    )(rep_p)

    # Tiny glue (O(N) data): build row/col views of the SAME norm vector so the
    # pdist diagonal is bitwise zero, plus label and validity (padding) vectors.
    norms = norms_col[:n, 0]
    norms_row = jnp.pad(norms, (0, np_c - n)).reshape(1, np_c)

    q_vec = q.reshape(n).astype(jnp.float32)
    q_col = jnp.pad(q_vec, (0, np_r - n)).reshape(np_r, 1)
    q_row = jnp.pad(q_vec, (0, np_c - n)).reshape(1, np_c)

    ones = jnp.ones((n,), jnp.float32)
    v_col = jnp.pad(ones, (0, np_r - n)).reshape(np_r, 1)
    v_row = jnp.pad(ones, (0, np_c - n)).reshape(1, np_c)

    m_arr = jnp.asarray([m], dtype=jnp.float32)

    # --- stage 2: tiled NxN elementwise/erf stage ----------------------------
    grid = (np_r // tile_r, np_c // tile_c)
    col_spec = pl.BlockSpec((tile_r, 1), lambda ri, ci: (ri, 0))
    row_spec = pl.BlockSpec((1, tile_c), lambda ri, ci: (0, ci))

    partials = pl.pallas_call(
        _quality_loss_kernel,
        out_shape=jax.ShapeDtypeStruct((grid[0], tile_c), jnp.float32),
        grid=grid,
        in_specs=[
            col_spec, row_spec,                                  # norms
            col_spec, row_spec,                                  # labels
            col_spec, row_spec,                                  # validity mask
            pl.BlockSpec(memory_space=pltpu.MemorySpace.SMEM),   # m scalar (1,)
        ],
        out_specs=pl.BlockSpec((1, tile_c), lambda ri, ci: (ri, 0)),
        scratch_shapes=[pltpu.VMEM((1, tile_c), jnp.float32)],
        compiler_params=pltpu.CompilerParams(
            dimension_semantics=("parallel", "arbitrary")),
    )(norms_col, norms_row, q_col, q_row, v_col, v_row, m_arr)

    return jnp.sum(partials) / jnp.float32(n * n - n)


def _reference(represent, q, m):
    # Pure-JAX reference mirroring the torch code exactly.
    x = represent.astype(jnp.float32)
    n = x.shape[0]
    c1 = jnp.sqrt(jnp.sum(x * x, axis=-1)).reshape(n, 1)
    c2 = jnp.sqrt(jnp.sum(x * x, axis=-1)).reshape(1, n)
    pdist = jnp.abs(c1 - c2) * (1.0 - jnp.eye(n, dtype=jnp.float32))
    qc = q.reshape(n, 1).astype(jnp.float32)
    q_count = jnp.where(qc != 2.0, 1, 0)
    q_mask = q_count == q_count.T
    pos_mask = qc == qc.T
    neg_mask = jnp.logical_not(pos_mask)
    pos_pair = jnp.where(pos_mask, pdist, 0.0)
    neg_pair = jnp.maximum(0.0, jnp.where(neg_mask, m - pdist, 0.0))
    erf = jax.scipy.special.erf
    pos_w = 0.5 * (1.0 + erf((pos_pair - 0.2) / (0.5 * _SQRT2)))
    neg_w = 0.5 * (1.0 + erf((neg_pair - 0.05) / (0.05 * _SQRT2)))
    loss_mat = jnp.where(q_mask, pos_w * pos_pair + neg_w * neg_pair, 0.0)
    if n == 1:
        return jnp.zeros((), jnp.float32)
    return jnp.sum(loss_mat) / (n * n - n)


if __name__ == "__main__":
    key = jax.random.PRNGKey(0)
    k1, k2, k3, k4 = jax.random.split(key, 4)
    m = 1.0

    # Case 1: aligned small shapes.
    n1, d1 = 8, 32
    rep1 = jax.random.normal(k1, (n1, d1), dtype=jnp.float32)
    q1 = jax.random.randint(k2, (n1,), 0, 3).astype(jnp.float32)  # labels {0,1,2}
    out1 = quality_loss(rep1, q1, m)
    jax.block_until_ready(out1)
    ref1 = _reference(rep1, q1, m)
    assert abs(float(out1) - float(ref1)) < 1e-4, (float(out1), float(ref1))

    # Case 2: shapes that exercise the in-kernel padding / validity mask path.
    n2, d2 = 10, 32
    rep2 = jax.random.normal(k3, (n2, d2), dtype=jnp.float32)
    q2 = jax.random.randint(k4, (n2,), 0, 3).astype(jnp.float32)
    out2 = quality_loss(rep2, q2, m)
    jax.block_until_ready(out2)
    ref2 = _reference(rep2, q2, m)
    assert abs(float(out2) - float(ref2)) < 1e-4, (float(out2), float(ref2))

    print("KERNEL_OK")
</pallas_src>

<mosaic_0001>
module attributes {stable_mosaic.version = 11 : i64} {
  func.func @_row_norm_kernel(%arg0: i32, %arg1: memref<8x32xf32, #tpu.memory_space<vmem>>, %arg2: memref<8x1xf32, #tpu.memory_space<vmem>>) attributes {dimension_semantics = [#tpu.dimension_semantics<parallel>], iteration_bounds = array<i64: 1>, scalar_prefetch = 0 : i64, scratch_operands = 0 : i64, tpu.core_type = #tpu.core_type<tc>, window_params = [{transform_indices = @transform_0, window_bounds = array<i64: 8, 32>}, {transform_indices = @transform_1, window_bounds = array<i64: 8, 1>}]} {
    %c0 = arith.constant 0 : index
    %c0_0 = arith.constant 0 : index
    %0 = vector.load %arg1[%c0, %c0_0] : memref<8x32xf32, #tpu.memory_space<vmem>>, vector<8x32xf32>
    %1 = arith.mulf %0, %0 : vector<8x32xf32>
    %cst = arith.constant dense<0.000000e+00> : vector<8xf32>
    %2 = vector.multi_reduction <add>, %1, %cst [1] : vector<8x32xf32> to vector<8xf32>
    %3 = vector.shape_cast %2 : vector<8xf32> to vector<8x1xf32>
    %4 = math.sqrt %3 : vector<8x1xf32>
    %c0_1 = arith.constant 0 : index
    %c0_2 = arith.constant 0 : index
    %5 = vector.load %arg2[%c0_1, %c0_2] : memref<8x1xf32, #tpu.memory_space<vmem>>, vector<8x1xf32>
    tpu.vector_store %arg2[%c0_1, %c0_2], %4 {strides = array<i32>} : memref<8x1xf32, #tpu.memory_space<vmem>>, vector<8x1xf32>,
    return
  }
  func.func @transform_0(%arg0: i32) -> (i32, i32) {
    %c0_i32 = arith.constant 0 : i32
    %c0_i32_0 = arith.constant 0 : i32
    return %arg0, %c0_i32 : i32, i32
  }
  func.func @transform_1(%arg0: i32) -> (i32, i32) {
    %c0_i32 = arith.constant 0 : i32
    %c0_i32_0 = arith.constant 0 : i32
    return %arg0, %c0_i32 : i32, i32
  }
}

</mosaic_0001>

<llo_original>
// kernel: tpu_custom_call.1
$region0: #{tpu_custom_call.1}
  #allocation0 [shape = 'u32[]', space=smem, size = 0x4, offset = 0x4, fixed_abs, tag = 'smem constant byte address 0x4 - core index']
  #allocation1 [shape = 'u32[144,128]{1,0:T(1,128)}', space=vmem, size = 0x12000, scoped, tag = 'internal scratch']
  %s0 = inlined_call_operand.hbm [shape: f32[8,32], index: 0, kind: input, shape index: {}]
  %s1 = inlined_call_operand.vmem [shape: f32[8,1], index: 1, kind: output, shape index: {}]
  %s2 = sld [smem:[#allocation0]]
  $region18: #{tpu_custom_call.1} parent=0
    _
  %s4 = ssub.s32 1, %s2
  %s5 = scalar_select 0, %s4, %s2
  $region1: #{tpu_custom_call.1} parent=0
    #allocation2 [shape = 'u8[4096]{0}', space=vmem, size = 0x1000, scoped, tag = 'input window, operand 0, single buffered']
    #allocation3 [shape = 's32[1]{0}', space=sflag, size = 0x4, scoped, tag = 'scoped memory for tpu_custom_call.1']
    %6 = vsyncpa [#allocation3], 0
    // Predicated region
    $region2: #{tpu_custom_call.1} parent=1 // pred_check
      _
    $region3: #{tpu_custom_call.1} parent=1 // pred_check_branch
      %8 = sbr.rel (0) target = $region5
    $region4: #{tpu_custom_call.1} parent=1 // pred_region
      %s10 = ssub.s32 128, 128
      %11 = vsyncadd [#allocation3], %s10
      %s13 = sshll.u32 [#allocation2], 4
      %s14 = int_to_ptr.vmem [resolvable:$true] %s13
      %16 = dma.hbm_to_vmem [thread:$0]  %s0, 128, %s14, [#allocation3]
    $region5: #{tpu_custom_call.1} parent=1 // pred_fallthru
      _
    // Predicated region
    $region6: #{tpu_custom_call.1} parent=1 // pred_check
      _
    $region7: #{tpu_custom_call.1} parent=1 // pred_check_branch
      %18 = sbr.rel (0) target = $region9
    $region8: #{tpu_custom_call.1} parent=1 // pred_region
      %19 = dma.done [#allocation3], 128
    $region9: #{tpu_custom_call.1} parent=1 // pred_fallthru
      _
    %v20 = vld [vmem:[#allocation2] sm:$0xff]
    %v21 = vmul.f32 %v20, %v20
    %vm22 = vcmask 261120
    %v23 = vsel %vm22, %v21, 0.0
    %24 = vadd.xlane.f32.xlu0 %v23
    %v25 = vpop.xlane.xlu0 %24
    %v26 = vrsqrt.pop %v25
    %v27 = vmul.f32 %v25, %v26
    %vm28 = vcmp.eq.f32.partialorder %v25, inf
    %v29 = vsel %vm28, %v25, %v27
    %vm30 = vcmp.eq.f32.partialorder %v25, 0.0
    %v31 = vand.u32 %v25, 2147483648
    %v32 = vsel %vm30, %v31, %v29
    %vm33 = vcmask 7168
    %34 = vst.msk [vmem:[%s1] sm:$0xff] %vm33, %v32
    // Predicated region
    $region10: #{tpu_custom_call.1} parent=1 // pred_check
      _
    $region11: #{tpu_custom_call.1} parent=1 // pred_check_branch
      %36 = sbr.rel (0) target = $region13
    $region12: #{tpu_custom_call.1} parent=1 // pred_region
      _
    $region13: #{tpu_custom_call.1} parent=1 // pred_fallthru
      _
    // Predicated region
    $region14: #{tpu_custom_call.1} parent=1 // pred_check
      _
    $region15: #{tpu_custom_call.1} parent=1 // pred_check_branch
      %38 = sbr.rel (0) target = $region17
    $region16: #{tpu_custom_call.1} parent=1 // pred_region
      _
    $region17: #{tpu_custom_call.1} parent=1 // pred_fallthru
      _
    %39 = vsyncpa [#allocation3], 1

</llo_original>
